<compile_context>
chip_gen: v6e
topology: v6e:2x2x1
jax: 0.10.0
libtpu: 0.0.40
codegen_flags: <defaults>
</compile_context>

<pallas_src>
import jax
import jax.numpy as jnp
import numpy as np
from jax import lax
from jax.experimental import pallas as pl
from jax.experimental.pallas import tpu as pltpu


def _make_kernel(W, L, Pp):
    """Fused bottleneck kernel; L = images_per_step * H * W lanes."""

    def kernel(x_ref, w1_ref, b1_ref, w2_ref, mask_ref, b2_ref,
               w3_ref, b3_ref, out_ref, stk_ref):
        x = x_ref[0]                                                 # (Cin, L)

        # ---- conv1 (1x1) + BN1 (folded) + ReLU : one matmul ----
        t1 = jnp.dot(w1_ref[...], x, preferred_element_type=jnp.float32)
        t1 = jnp.maximum(t1 + b1_ref[...], 0.0)                      # (Pp, L)

        # ---- conv2 (3x3, pad=1, stride=1) + BN2 (folded) + ReLU ----
        # Stack the 9 lane-rolled, boundary-masked taps into a (9*Pp, L)
        # scratch, then contract once with the fused (Pp, 9*Pp) weight.
        for tap in range(9):
            ry, rx = tap // 3 - 1, tap % 3 - 1
            off = ry * W + rx
            if off == 0:
                shifted = t1                                         # center tap
            else:
                shifted = pltpu.roll(t1, shift=(-off) % L, axis=1)
                shifted = shifted * mask_ref[tap]                    # (1, L) mask
            stk_ref[pl.ds(tap * Pp, Pp), :] = shifted
        t2 = jnp.dot(w2_ref[...], stk_ref[...],
                     preferred_element_type=jnp.float32)             # (Pp, L)
        t2 = jnp.maximum(t2 + b2_ref[...], 0.0)

        # ---- conv3 (1x1) + BN3 (folded) ----
        t3 = jnp.dot(w3_ref[...], t2, preferred_element_type=jnp.float32)
        t3 = t3 + b3_ref[...]                                        # (Cout, L)

        # ---- residual add (downsample is None -> residual = x) + ReLU ----
        out_ref[0] = jnp.maximum(t3 + x, 0.0)

    return kernel


def _make_tap_masks(H, W):
    """(9, 1, H*W) float32 validity masks for the 3x3 taps (pad=1)."""
    hh, ww = np.meshgrid(np.arange(H), np.arange(W), indexing="ij")
    masks = []
    for dy in range(3):
        for dx in range(3):
            ry, rx = dy - 1, dx - 1
            valid = ((hh + ry >= 0) & (hh + ry < H) &
                     (ww + rx >= 0) & (ww + rx < W))
            masks.append(valid.reshape(1, H * W))
    return jnp.asarray(np.stack(masks), dtype=jnp.float32)


def bottleneck_forward(x_nchw, kp, *, images_per_step=None):
    """x_nchw: (N, Cin, H, W) float32 (PyTorch layout). Returns same layout.

    images_per_step: how many images share one grid step's lane axis.
      Default N (whole batch folded -> 1 step; best on single-TC v5e/v6e).
      Use N//2 (or 1) on v7x so the "parallel" grid spans both TensorCores.
    """
    N, Cin, H, W = x_nchw.shape
    Pp = kp["w1"].shape[0]          # padded bottleneck width (multiple of 8)
    Cout = kp["w3"].shape[0]
    assert Cin == Cout, "stride=1 / downsample=None path requires inplanes == 4*planes"
    M = H * W
    G = N if images_per_step is None else images_per_step
    assert N % G == 0
    steps = N // G
    L = G * M

    # (N, Cin, H, W) -> (steps, Cin, G*M): fold G images into the lane axis.
    x_flat = (x_nchw.reshape(steps, G, Cin, M)
              .transpose(0, 2, 1, 3)
              .reshape(steps, Cin, L))

    # Per-image boundary masks tiled across the folded lane axis: rolls only
    # ever wrap onto positions the mask marks invalid, so no cross-image leak.
    masks = jnp.tile(_make_tap_masks(H, W), (1, 1, G))               # (9, 1, L)

    kernel = _make_kernel(W, L, Pp)

    def const(shape):
        # Constant block index -> weights/biases/masks fetched once, never re-DMA'd.
        return pl.BlockSpec(shape, lambda s, _r=len(shape): (0,) * _r)

    out_flat = pl.pallas_call(
        kernel,
        out_shape=jax.ShapeDtypeStruct((steps, Cout, L), jnp.float32),
        grid=(steps,),
        in_specs=[
            pl.BlockSpec((1, Cin, L), lambda s: (s, 0, 0)),   # x (per step)
            const((Pp, Cin)),                                 # w1 (BN1-scaled, padded)
            const((Pp, 1)),                                   # b1
            const((Pp, 9 * Pp)),                              # w2 fused taps (BN2-scaled)
            const((9, 1, L)),                                 # tap validity masks
            const((Pp, 1)),                                   # b2
            const((Cout, Pp)),                                # w3 (BN3-scaled)
            const((Cout, 1)),                                 # b3
        ],
        out_specs=pl.BlockSpec((1, Cout, L), lambda s: (s, 0, 0)),
        scratch_shapes=[pltpu.VMEM((9 * Pp, L), jnp.float32)],
        compiler_params=pltpu.CompilerParams(
            dimension_semantics=("parallel",)),
    )(x_flat, kp["w1"], kp["b1"], kp["w2"], masks, kp["b2"], kp["w3"], kp["b3"])

    return (out_flat.reshape(steps, Cout, G, M)
            .transpose(0, 2, 1, 3)
            .reshape(N, Cout, H, W))


def make_params(key, inplanes, planes):
    """Deterministic synthetic conv weights (OIHW) + eval-mode BN stats."""
    eps = 1e-5
    ks = jax.random.split(key, 15)
    cout = planes * 4

    def bn_fold(kg, kb, km, kv, c):
        gamma = 0.5 + jax.random.uniform(kg, (c,), jnp.float32)
        beta = 0.1 * jax.random.normal(kb, (c,), jnp.float32)
        mean = 0.1 * jax.random.normal(km, (c,), jnp.float32)
        var = 0.5 + jax.random.uniform(kv, (c,), jnp.float32)
        scale = gamma / jnp.sqrt(var + eps)
        bias = beta - mean * scale
        return scale, bias

    w1 = jax.random.normal(ks[0], (planes, inplanes, 1, 1), jnp.float32) / np.sqrt(inplanes)
    w2 = jax.random.normal(ks[1], (planes, planes, 3, 3), jnp.float32) / np.sqrt(9 * planes)
    w3 = jax.random.normal(ks[2], (cout, planes, 1, 1), jnp.float32) / np.sqrt(planes)
    s1, b1 = bn_fold(ks[3], ks[4], ks[5], ks[6], planes)
    s2, b2 = bn_fold(ks[7], ks[8], ks[9], ks[10], planes)
    s3, b3 = bn_fold(ks[11], ks[12], ks[13], ks[14], cout)
    return dict(w1=w1, w2=w2, w3=w3, s1=s1, b1=b1, s2=s2, b2=b2, s3=s3, b3=b3)


def prepare_kernel_params(raw, pad_to=8):
    """Fold BN scale into conv weights, zero-pad P to the sublane tile, fuse 3x3 taps."""
    P, Cin = raw["w1"].shape[:2]
    Cout = raw["w3"].shape[0]
    Pp = -(-P // pad_to) * pad_to

    w1 = raw["w1"][:, :, 0, 0] * raw["s1"][:, None]                  # (P, Cin)
    w1 = jnp.zeros((Pp, Cin), jnp.float32).at[:P].set(w1)
    b1 = jnp.zeros((Pp, 1), jnp.float32).at[:P, 0].set(raw["b1"])

    # (Pout, Pin, 3, 3) -> (9, Pout, Pin), tap = dy*3+dx; scale out-chan; pad; fuse.
    w2 = (jnp.transpose(raw["w2"], (2, 3, 0, 1)).reshape(9, P, P)
          * raw["s2"][None, :, None])
    w2p = jnp.zeros((9, Pp, Pp), jnp.float32).at[:, :P, :P].set(w2)
    w2f = jnp.transpose(w2p, (1, 0, 2)).reshape(Pp, 9 * Pp)          # (Pp, 9*Pp)
    b2 = jnp.zeros((Pp, 1), jnp.float32).at[:P, 0].set(raw["b2"])

    w3 = raw["w3"][:, :, 0, 0] * raw["s3"][:, None]                  # (Cout, P)
    w3 = jnp.zeros((Cout, Pp), jnp.float32).at[:, :P].set(w3)
    b3 = raw["b3"].reshape(Cout, 1)

    return dict(w1=w1, b1=b1, w2=w2f, b2=b2, w3=w3, b3=b3)


def bottleneck_reference(x_nchw, raw):
    """Pure-JAX (XLA conv) reference in NCHW with unfolded scale/bias."""
    dn = ("NCHW", "OIHW", "NCHW")

    def bn(t, s, b):
        return t * s[None, :, None, None] + b[None, :, None, None]

    t = lax.conv_general_dilated(x_nchw, raw["w1"], (1, 1), "VALID",
                                 dimension_numbers=dn)
    t = jnp.maximum(bn(t, raw["s1"], raw["b1"]), 0.0)
    t = lax.conv_general_dilated(t, raw["w2"], (1, 1), ((1, 1), (1, 1)),
                                 dimension_numbers=dn)
    t = jnp.maximum(bn(t, raw["s2"], raw["b2"]), 0.0)
    t = lax.conv_general_dilated(t, raw["w3"], (1, 1), "VALID",
                                 dimension_numbers=dn)
    t = bn(t, raw["s3"], raw["b3"])
    return jnp.maximum(t + x_nchw, 0.0)


if __name__ == "__main__":
    # Module config: Bottleneck(inplanes=16, planes=4, stride=1, downsample=None)
    inplanes, planes = 16, 4
    N, H, W = 2, 16, 16

    key = jax.random.PRNGKey(0)
    kx, kp = jax.random.split(key)
    x_nchw = jax.random.normal(kx, (N, inplanes, H, W), jnp.float32)  # NCHW, like PyTorch
    raw = make_params(kp, inplanes, planes)
    kparams = prepare_kernel_params(raw)

    ref = jax.block_until_ready(bottleneck_reference(x_nchw, raw))

    # v5e/v6e path: whole batch folded into the lane axis -> single grid step.
    out = jax.block_until_ready(bottleneck_forward(x_nchw, kparams))
    np.testing.assert_allclose(np.asarray(out), np.asarray(ref),
                               rtol=1e-4, atol=1e-4)

    # v7x path: one image per step -> 2-step "parallel" grid (one per TensorCore).
    out2 = jax.block_until_ready(
        bottleneck_forward(x_nchw, kparams, images_per_step=1))
    np.testing.assert_allclose(np.asarray(out2), np.asarray(ref),
                               rtol=1e-4, atol=1e-4)

    print("KERNEL_OK")
</pallas_src>

<mosaic_0001>
module attributes {stable_mosaic.version = 11 : i64} {
  func.func @kernel(%arg0: i32, %arg1: memref<1x16x512xf32, #tpu.memory_space<vmem>>, %arg2: memref<8x16xf32, #tpu.memory_space<vmem>>, %arg3: memref<8x1xf32, #tpu.memory_space<vmem>>, %arg4: memref<8x72xf32, #tpu.memory_space<vmem>>, %arg5: memref<9x1x512xf32, #tpu.memory_space<vmem>>, %arg6: memref<8x1xf32, #tpu.memory_space<vmem>>, %arg7: memref<16x8xf32, #tpu.memory_space<vmem>>, %arg8: memref<16x1xf32, #tpu.memory_space<vmem>>, %arg9: memref<1x16x512xf32, #tpu.memory_space<vmem>>, %arg10: memref<72x512xf32, #tpu.memory_space<vmem>>) attributes {dimension_semantics = [#tpu.dimension_semantics<parallel>], iteration_bounds = array<i64: 1>, scalar_prefetch = 0 : i64, scratch_operands = 1 : i64, tpu.core_type = #tpu.core_type<tc>, window_params = [{transform_indices = @transform_0, window_bounds = array<i64: 1, 16, 512>}, {pipeline_mode = #tpu.pipeline_mode<synchronous>, transform_indices = @transform_1, window_bounds = array<i64: 8, 16>}, {pipeline_mode = #tpu.pipeline_mode<synchronous>, transform_indices = @transform_2, window_bounds = array<i64: 8, 1>}, {pipeline_mode = #tpu.pipeline_mode<synchronous>, transform_indices = @transform_3, window_bounds = array<i64: 8, 72>}, {pipeline_mode = #tpu.pipeline_mode<synchronous>, transform_indices = @transform_4, window_bounds = array<i64: 9, 1, 512>}, {pipeline_mode = #tpu.pipeline_mode<synchronous>, transform_indices = @transform_5, window_bounds = array<i64: 8, 1>}, {pipeline_mode = #tpu.pipeline_mode<synchronous>, transform_indices = @transform_6, window_bounds = array<i64: 16, 8>}, {pipeline_mode = #tpu.pipeline_mode<synchronous>, transform_indices = @transform_7, window_bounds = array<i64: 16, 1>}, {transform_indices = @transform_8, window_bounds = array<i64: 1, 16, 512>}]} {
    %c0 = arith.constant 0 : index
    %c0_0 = arith.constant 0 : index
    %c0_1 = arith.constant 0 : index
    %0 = vector.load %arg1[%c0, %c0_0, %c0_1] : memref<1x16x512xf32, #tpu.memory_space<vmem>>, vector<1x16x512xf32>
    %1 = vector.shape_cast %0 : vector<1x16x512xf32> to vector<16x512xf32>
    %c0_2 = arith.constant 0 : index
    %c0_3 = arith.constant 0 : index
    %2 = vector.load %arg2[%c0_2, %c0_3] : memref<8x16xf32, #tpu.memory_space<vmem>>, vector<8x16xf32>
    %cst = arith.constant dense<0.000000e+00> : vector<8x512xf32>
    %3 = tpu.matmul %2, %1, %cst {dimension_numbers = #tpu.dot_dimension_numbers<[1], [0], [0], [1], [0, 0, 1, 1], [], []>} : vector<8x16xf32>, vector<16x512xf32>, vector<8x512xf32> -> vector<8x512xf32>
    %c0_4 = arith.constant 0 : index
    %c0_5 = arith.constant 0 : index
    %4 = vector.load %arg3[%c0_4, %c0_5] : memref<8x1xf32, #tpu.memory_space<vmem>>, vector<8x1xf32>
    %5 = vector.broadcast %4 : vector<8x1xf32> to vector<8x512xf32>
    %6 = arith.addf %3, %5 : vector<8x512xf32>
    %cst_6 = arith.constant 0.000000e+00 : f32
    %7 = vector.broadcast %cst_6 : f32 to vector<8x512xf32>
    %8 = arith.maximumf %6, %7 : vector<8x512xf32>
    %c17_i32 = arith.constant 17 : i32
    %9 = tpu.dynamic_rotate %8 by %c17_i32 dim 1 : vector<8x512xf32>, i32 -> vector<8x512xf32>
    %c0_7 = arith.constant 0 : index
    %c0_8 = arith.constant 0 : index
    %c0_9 = arith.constant 0 : index
    %10 = vector.load %arg5[%c0_7, %c0_8, %c0_9] : memref<9x1x512xf32, #tpu.memory_space<vmem>>, vector<1x1x512xf32>
    %11 = vector.shape_cast %10 : vector<1x1x512xf32> to vector<1x512xf32>
    %12 = vector.broadcast %11 : vector<1x512xf32> to vector<8x512xf32>
    %13 = arith.mulf %9, %12 : vector<8x512xf32>
    %c0_10 = arith.constant 0 : index
    %c0_11 = arith.constant 0 : index
    %14 = vector.load %arg10[%c0_10, %c0_11] : memref<72x512xf32, #tpu.memory_space<vmem>>, vector<8x512xf32>
    tpu.vector_store %arg10[%c0_10, %c0_11], %13 {strides = array<i32>} : memref<72x512xf32, #tpu.memory_space<vmem>>, vector<8x512xf32>,
    %c16_i32 = arith.constant 16 : i32
    %15 = tpu.dynamic_rotate %8 by %c16_i32 dim 1 : vector<8x512xf32>, i32 -> vector<8x512xf32>
    %c1 = arith.constant 1 : index
    %c0_12 = arith.constant 0 : index
    %c0_13 = arith.constant 0 : index
    %16 = vector.load %arg5[%c1, %c0_12, %c0_13] : memref<9x1x512xf32, #tpu.memory_space<vmem>>, vector<1x1x512xf32>
    %17 = vector.shape_cast %16 : vector<1x1x512xf32> to vector<1x512xf32>
    %18 = vector.broadcast %17 : vector<1x512xf32> to vector<8x512xf32>
    %19 = arith.mulf %15, %18 : vector<8x512xf32>
    %c8 = arith.constant 8 : index
    %c0_14 = arith.constant 0 : index
    %20 = vector.load %arg10[%c8, %c0_14] : memref<72x512xf32, #tpu.memory_space<vmem>>, vector<8x512xf32>
    tpu.vector_store %arg10[%c8, %c0_14], %19 {strides = array<i32>} : memref<72x512xf32, #tpu.memory_space<vmem>>, vector<8x512xf32>,
    %c15_i32 = arith.constant 15 : i32
    %21 = tpu.dynamic_rotate %8 by %c15_i32 dim 1 : vector<8x512xf32>, i32 -> vector<8x512xf32>
    %c2 = arith.constant 2 : index
    %c0_15 = arith.constant 0 : index
    %c0_16 = arith.constant 0 : index
    %22 = vector.load %arg5[%c2, %c0_15, %c0_16] : memref<9x1x512xf32, #tpu.memory_space<vmem>>, vector<1x1x512xf32>
    %23 = vector.shape_cast %22 : vector<1x1x512xf32> to vector<1x512xf32>
    %24 = vector.broadcast %23 : vector<1x512xf32> to vector<8x512xf32>
    %25 = arith.mulf %21, %24 : vector<8x512xf32>
    %c16 = arith.constant 16 : index
    %c0_17 = arith.constant 0 : index
    %26 = vector.load %arg10[%c16, %c0_17] : memref<72x512xf32, #tpu.memory_space<vmem>>, vector<8x512xf32>
    tpu.vector_store %arg10[%c16, %c0_17], %25 {strides = array<i32>} : memref<72x512xf32, #tpu.memory_space<vmem>>, vector<8x512xf32>,
    %c1_i32 = arith.constant 1 : i32
    %27 = tpu.dynamic_rotate %8 by %c1_i32 dim 1 : vector<8x512xf32>, i32 -> vector<8x512xf32>
    %c3 = arith.constant 3 : index
    %c0_18 = arith.constant 0 : index
    %c0_19 = arith.constant 0 : index
    %28 = vector.load %arg5[%c3, %c0_18, %c0_19] : memref<9x1x512xf32, #tpu.memory_space<vmem>>, vector<1x1x512xf32>
    %29 = vector.shape_cast %28 : vector<1x1x512xf32> to vector<1x512xf32>
    %30 = vector.broadcast %29 : vector<1x512xf32> to vector<8x512xf32>
    %31 = arith.mulf %27, %30 : vector<8x512xf32>
    %c24 = arith.constant 24 : index
    %c0_20 = arith.constant 0 : index
    %32 = vector.load %arg10[%c24, %c0_20] : memref<72x512xf32, #tpu.memory_space<vmem>>, vector<8x512xf32>
    tpu.vector_store %arg10[%c24, %c0_20], %31 {strides = array<i32>} : memref<72x512xf32, #tpu.memory_space<vmem>>, vector<8x512xf32>,
    %c32 = arith.constant 32 : index
    %c0_21 = arith.constant 0 : index
    %33 = vector.load %arg10[%c32, %c0_21] : memref<72x512xf32, #tpu.memory_space<vmem>>, vector<8x512xf32>
    tpu.vector_store %arg10[%c32, %c0_21], %8 {strides = array<i32>} : memref<72x512xf32, #tpu.memory_space<vmem>>, vector<8x512xf32>,
    %c511_i32 = arith.constant 511 : i32
    %34 = tpu.dynamic_rotate %8 by %c511_i32 dim 1 : vector<8x512xf32>, i32 -> vector<8x512xf32>
    %c5 = arith.constant 5 : index
    %c0_22 = arith.constant 0 : index
    %c0_23 = arith.constant 0 : index
    %35 = vector.load %arg5[%c5, %c0_22, %c0_23] : memref<9x1x512xf32, #tpu.memory_space<vmem>>, vector<1x1x512xf32>
    %36 = vector.shape_cast %35 : vector<1x1x512xf32> to vector<1x512xf32>
    %37 = vector.broadcast %36 : vector<1x512xf32> to vector<8x512xf32>
    %38 = arith.mulf %34, %37 : vector<8x512xf32>
    %c40 = arith.constant 40 : index
    %c0_24 = arith.constant 0 : index
    %39 = vector.load %arg10[%c40, %c0_24] : memref<72x512xf32, #tpu.memory_space<vmem>>, vector<8x512xf32>
    tpu.vector_store %arg10[%c40, %c0_24], %38 {strides = array<i32>} : memref<72x512xf32, #tpu.memory_space<vmem>>, vector<8x512xf32>,
    %c497_i32 = arith.constant 497 : i32
    %40 = tpu.dynamic_rotate %8 by %c497_i32 dim 1 : vector<8x512xf32>, i32 -> vector<8x512xf32>
    %c6 = arith.constant 6 : index
    %c0_25 = arith.constant 0 : index
    %c0_26 = arith.constant 0 : index
    %41 = vector.load %arg5[%c6, %c0_25, %c0_26] : memref<9x1x512xf32, #tpu.memory_space<vmem>>, vector<1x1x512xf32>
    %42 = vector.shape_cast %41 : vector<1x1x512xf32> to vector<1x512xf32>
    %43 = vector.broadcast %42 : vector<1x512xf32> to vector<8x512xf32>
    %44 = arith.mulf %40, %43 : vector<8x512xf32>
    %c48 = arith.constant 48 : index
    %c0_27 = arith.constant 0 : index
    %45 = vector.load %arg10[%c48, %c0_27] : memref<72x512xf32, #tpu.memory_space<vmem>>, vector<8x512xf32>
    tpu.vector_store %arg10[%c48, %c0_27], %44 {strides = array<i32>} : memref<72x512xf32, #tpu.memory_space<vmem>>, vector<8x512xf32>,
    %c496_i32 = arith.constant 496 : i32
    %46 = tpu.dynamic_rotate %8 by %c496_i32 dim 1 : vector<8x512xf32>, i32 -> vector<8x512xf32>
    %c7 = arith.constant 7 : index
    %c0_28 = arith.constant 0 : index
    %c0_29 = arith.constant 0 : index
    %47 = vector.load %arg5[%c7, %c0_28, %c0_29] : memref<9x1x512xf32, #tpu.memory_space<vmem>>, vector<1x1x512xf32>
    %48 = vector.shape_cast %47 : vector<1x1x512xf32> to vector<1x512xf32>
    %49 = vector.broadcast %48 : vector<1x512xf32> to vector<8x512xf32>
    %50 = arith.mulf %46, %49 : vector<8x512xf32>
    %c56 = arith.constant 56 : index
    %c0_30 = arith.constant 0 : index
    %51 = vector.load %arg10[%c56, %c0_30] : memref<72x512xf32, #tpu.memory_space<vmem>>, vector<8x512xf32>
    tpu.vector_store %arg10[%c56, %c0_30], %50 {strides = array<i32>} : memref<72x512xf32, #tpu.memory_space<vmem>>, vector<8x512xf32>,
    %c495_i32 = arith.constant 495 : i32
    %52 = tpu.dynamic_rotate %8 by %c495_i32 dim 1 : vector<8x512xf32>, i32 -> vector<8x512xf32>
    %c8_31 = arith.constant 8 : index
    %c0_32 = arith.constant 0 : index
    %c0_33 = arith.constant 0 : index
    %53 = vector.load %arg5[%c8_31, %c0_32, %c0_33] : memref<9x1x512xf32, #tpu.memory_space<vmem>>, vector<1x1x512xf32>
    %54 = vector.shape_cast %53 : vector<1x1x512xf32> to vector<1x512xf32>
    %55 = vector.broadcast %54 : vector<1x512xf32> to vector<8x512xf32>
    %56 = arith.mulf %52, %55 : vector<8x512xf32>
    %c64 = arith.constant 64 : index
    %c0_34 = arith.constant 0 : index
    %57 = vector.load %arg10[%c64, %c0_34] : memref<72x512xf32, #tpu.memory_space<vmem>>, vector<8x512xf32>
    tpu.vector_store %arg10[%c64, %c0_34], %56 {strides = array<i32>} : memref<72x512xf32, #tpu.memory_space<vmem>>, vector<8x512xf32>,
    %c0_35 = arith.constant 0 : index
    %c0_36 = arith.constant 0 : index
    %58 = vector.load %arg4[%c0_35, %c0_36] : memref<8x72xf32, #tpu.memory_space<vmem>>, vector<8x72xf32>
    %c0_37 = arith.constant 0 : index
    %c0_38 = arith.constant 0 : index
    %59 = vector.load %arg10[%c0_37, %c0_38] : memref<72x512xf32, #tpu.memory_space<vmem>>, vector<72x512xf32>
    %cst_39 = arith.constant dense<0.000000e+00> : vector<8x512xf32>
    %60 = tpu.matmul %58, %59, %cst_39 {dimension_numbers = #tpu.dot_dimension_numbers<[1], [0], [0], [1], [0, 0, 1, 1], [], []>} : vector<8x72xf32>, vector<72x512xf32>, vector<8x512xf32> -> vector<8x512xf32>
    %c0_40 = arith.constant 0 : index
    %c0_41 = arith.constant 0 : index
    %61 = vector.load %arg6[%c0_40, %c0_41] : memref<8x1xf32, #tpu.memory_space<vmem>>, vector<8x1xf32>
    %62 = vector.broadcast %61 : vector<8x1xf32> to vector<8x512xf32>
    %63 = arith.addf %60, %62 : vector<8x512xf32>
    %cst_42 = arith.constant 0.000000e+00 : f32
    %64 = vector.broadcast %cst_42 : f32 to vector<8x512xf32>
    %65 = arith.maximumf %63, %64 : vector<8x512xf32>
    %c0_43 = arith.constant 0 : index
    %c0_44 = arith.constant 0 : index
    %66 = vector.load %arg7[%c0_43, %c0_44] : memref<16x8xf32, #tpu.memory_space<vmem>>, vector<16x8xf32>
    %cst_45 = arith.constant dense<0.000000e+00> : vector<16x512xf32>
    %67 = tpu.matmul %66, %65, %cst_45 {dimension_numbers = #tpu.dot_dimension_numbers<[1], [0], [0], [1], [0, 0, 1, 1], [], []>} : vector<16x8xf32>, vector<8x512xf32>, vector<16x512xf32> -> vector<16x512xf32>
    %c0_46 = arith.constant 0 : index
    %c0_47 = arith.constant 0 : index
    %68 = vector.load %arg8[%c0_46, %c0_47] : memref<16x1xf32, #tpu.memory_space<vmem>>, vector<16x1xf32>
    %69 = vector.broadcast %68 : vector<16x1xf32> to vector<16x512xf32>
    %70 = arith.addf %67, %69 : vector<16x512xf32>
    %71 = arith.addf %70, %1 : vector<16x512xf32>
    %cst_48 = arith.constant 0.000000e+00 : f32
    %72 = vector.broadcast %cst_48 : f32 to vector<16x512xf32>
    %73 = arith.maximumf %71, %72 : vector<16x512xf32>
    %c0_49 = arith.constant 0 : index
    %c0_50 = arith.constant 0 : index
    %c0_51 = arith.constant 0 : index
    %74 = vector.load %arg9[%c0_49, %c0_50, %c0_51] : memref<1x16x512xf32, #tpu.memory_space<vmem>>, vector<1x16x512xf32>
    %75 = vector.shape_cast %74 : vector<1x16x512xf32> to vector<16x512xf32>
    %76 = vector.shape_cast %73 : vector<16x512xf32> to vector<1x16x512xf32>
    tpu.vector_store %arg9[%c0_49, %c0_50, %c0_51], %76 {strides = array<i32>} : memref<1x16x512xf32, #tpu.memory_space<vmem>>, vector<1x16x512xf32>,
    return
  }
  func.func @transform_0(%arg0: i32) -> (i32, i32, i32) {
    %c0_i32 = arith.constant 0 : i32
    %c0_i32_0 = arith.constant 0 : i32
    %c0_i32_1 = arith.constant 0 : i32
    return %arg0, %c0_i32, %c0_i32_0 : i32, i32, i32
  }
  func.func @transform_1(%arg0: i32) -> (i32, i32) {
    %c0_i32 = arith.constant 0 : i32
    %c0_i32_0 = arith.constant 0 : i32
    %c0_i32_1 = arith.constant 0 : i32
    return %c0_i32, %c0_i32_0 : i32, i32
  }
  func.func @transform_2(%arg0: i32) -> (i32, i32) {
    %c0_i32 = arith.constant 0 : i32
    %c0_i32_0 = arith.constant 0 : i32
    %c0_i32_1 = arith.constant 0 : i32
    return %c0_i32, %c0_i32_0 : i32, i32
  }
  func.func @transform_3(%arg0: i32) -> (i32, i32) {
    %c0_i32 = arith.constant 0 : i32
    %c0_i32_0 = arith.constant 0 : i32
    %c0_i32_1 = arith.constant 0 : i32
    return %c0_i32, %c0_i32_0 : i32, i32
  }
  func.func @transform_4(%arg0: i32) -> (i32, i32, i32) {
    %c0_i32 = arith.constant 0 : i32
    %c0_i32_0 = arith.constant 0 : i32
    %c0_i32_1 = arith.constant 0 : i32
    %c0_i32_2 = arith.constant 0 : i32
    return %c0_i32, %c0_i32_0, %c0_i32_1 : i32, i32, i32
  }
  func.func @transform_5(%arg0: i32) -> (i32, i32) {
    %c0_i32 = arith.constant 0 : i32
    %c0_i32_0 = arith.constant 0 : i32
    %c0_i32_1 = arith.constant 0 : i32
    return %c0_i32, %c0_i32_0 : i32, i32
  }
  func.func @transform_6(%arg0: i32) -> (i32, i32) {
    %c0_i32 = arith.constant 0 : i32
    %c0_i32_0 = arith.constant 0 : i32
    %c0_i32_1 = arith.constant 0 : i32
    return %c0_i32, %c0_i32_0 : i32, i32
  }
  func.func @transform_7(%arg0: i32) -> (i32, i32) {
    %c0_i32 = arith.constant 0 : i32
    %c0_i32_0 = arith.constant 0 : i32
    %c0_i32_1 = arith.constant 0 : i32
    return %c0_i32, %c0_i32_0 : i32, i32
  }
  func.func @transform_8(%arg0: i32) -> (i32, i32, i32) {
    %c0_i32 = arith.constant 0 : i32
    %c0_i32_0 = arith.constant 0 : i32
    %c0_i32_1 = arith.constant 0 : i32
    return %arg0, %c0_i32, %c0_i32_0 : i32, i32, i32
  }
}

</mosaic_0001>

<llo_original>
// kernel: tpu_custom_call.1
$region0: #{tpu_custom_call.1}
  #allocation0 [shape = 'u32[]', space=smem, size = 0x4, offset = 0x4, fixed_abs, tag = 'smem constant byte address 0x4 - core index']
  #allocation1 [shape = 'u32[144,128]{1,0:T(1,128)}', space=vmem, size = 0x12000, scoped, tag = 'internal scratch']
  #allocation2 [shape = 'f32[72,512]{1,0:T(8,128)}', space=vmem, size = 0x24000, scoped, tag = 'scratch operand']
  %s0 = inlined_call_operand.hbm [shape: f32[1,16,512], index: 0, kind: input, shape index: {}]
  %s1 = inlined_call_operand.vmem [shape: f32[8,16], index: 1, kind: input, shape index: {}]
  %s2 = inlined_call_operand.vmem [shape: f32[8,1], index: 2, kind: input, shape index: {}]
  %s3 = inlined_call_operand.vmem [shape: f32[8,72], index: 3, kind: input, shape index: {}]
  %s4 = inlined_call_operand.vmem [shape: f32[9,1,512], index: 4, kind: input, shape index: {}]
  %s5 = inlined_call_operand.vmem [shape: f32[8,1], index: 5, kind: input, shape index: {}]
  %s6 = inlined_call_operand.vmem [shape: f32[16,8], index: 6, kind: input, shape index: {}]
  %s7 = inlined_call_operand.vmem [shape: f32[16,1], index: 7, kind: input, shape index: {}]
  %s8 = inlined_call_operand.hbm [shape: f32[1,16,512], index: 8, kind: output, shape index: {}]
  %s9 = sld [smem:[#allocation0]]
  $region46: #{tpu_custom_call.1} parent=0
    _
  %s11 = ssub.s32 1, %s9
  %s12 = scalar_select 0, %s11, %s9
  $region1: #{tpu_custom_call.1} parent=0
    #allocation3 [shape = 'u8[32768]{0}', space=vmem, size = 0x8000, scoped, tag = 'input window, operand 0, single buffered']
    #allocation4 [shape = 's32[1]{0}', space=sflag, size = 0x4, scoped, tag = 'scoped memory for tpu_custom_call.1']
    #allocation5 [shape = 's32[1]{0}', space=sflag, size = 0x4, scoped, tag = 'scoped memory for tpu_custom_call.1']
    #allocation6 [shape = 'u8[32768]{0}', space=vmem, size = 0x8000, scoped, tag = 'output window, operand 0, single buffered']
    %13 = vsyncpa [#allocation4], 0
    %14 = vsyncpa [#allocation5], 0
    // Predicated region
    $region2: #{tpu_custom_call.1} parent=1 // pred_check
      _
    $region3: #{tpu_custom_call.1} parent=1 // pred_check_branch
      %16 = sbr.rel (0) target = $region5
    $region4: #{tpu_custom_call.1} parent=1 // pred_region
      %s18 = ssub.s32 1024, 1024
      %19 = vsyncadd [#allocation4], %s18
      %s20 = sshll.u32 [#allocation3], 4
      %s21 = int_to_ptr.vmem [resolvable:$true] %s20
      %26 = dma.hbm_to_vmem [thread:$0]  %s0, 1024, %s21, [#allocation4], 512, 512, 32
    $region5: #{tpu_custom_call.1} parent=1 // pred_fallthru
      _
    // Predicated region
    $region6: #{tpu_custom_call.1} parent=1 // pred_check
      _
    $region7: #{tpu_custom_call.1} parent=1 // pred_check_branch
      %28 = sbr.rel (0) target = $region9
    $region8: #{tpu_custom_call.1} parent=1 // pred_region
      _
    $region9: #{tpu_custom_call.1} parent=1 // pred_fallthru
      _
    // Predicated region
    $region10: #{tpu_custom_call.1} parent=1 // pred_check
      _
    $region11: #{tpu_custom_call.1} parent=1 // pred_check_branch
      %30 = sbr.rel (0) target = $region13
    $region12: #{tpu_custom_call.1} parent=1 // pred_region
      _
    $region13: #{tpu_custom_call.1} parent=1 // pred_fallthru
      _
    // Predicated region
    $region14: #{tpu_custom_call.1} parent=1 // pred_check
      _
    $region15: #{tpu_custom_call.1} parent=1 // pred_check_branch
      %32 = sbr.rel (0) target = $region17
    $region16: #{tpu_custom_call.1} parent=1 // pred_region
      _
    $region17: #{tpu_custom_call.1} parent=1 // pred_fallthru
      _
    // Predicated region
    $region18: #{tpu_custom_call.1} parent=1 // pred_check
      _
    $region19: #{tpu_custom_call.1} parent=1 // pred_check_branch
      %34 = sbr.rel (0) target = $region21
    $region20: #{tpu_custom_call.1} parent=1 // pred_region
      _
    $region21: #{tpu_custom_call.1} parent=1 // pred_fallthru
      _
    // Predicated region
    $region22: #{tpu_custom_call.1} parent=1 // pred_check
      _
    $region23: #{tpu_custom_call.1} parent=1 // pred_check_branch
      %36 = sbr.rel (0) target = $region25
    $region24: #{tpu_custom_call.1} parent=1 // pred_region
      _
    $region25: #{tpu_custom_call.1} parent=1 // pred_fallthru
      _
    // Predicated region
    $region26: #{tpu_custom_call.1} parent=1 // pred_check
      _
    $region27: #{tpu_custom_call.1} parent=1 // pred_check_branch
      %38 = sbr.rel (0) target = $region29
    $region28: #{tpu_custom_call.1} parent=1 // pred_region
      _
    $region29: #{tpu_custom_call.1} parent=1 // pred_fallthru
      _
    // Predicated region
    $region30: #{tpu_custom_call.1} parent=1 // pred_check
      _
    $region31: #{tpu_custom_call.1} parent=1 // pred_check_branch
      %40 = sbr.rel (0) target = $region33
    $region32: #{tpu_custom_call.1} parent=1 // pred_region
      _
    $region33: #{tpu_custom_call.1} parent=1 // pred_fallthru
      _
    // Predicated region
    $region34: #{tpu_custom_call.1} parent=1 // pred_check
      _
    $region35: #{tpu_custom_call.1} parent=1 // pred_check_branch
      %42 = sbr.rel (0) target = $region37
    $region36: #{tpu_custom_call.1} parent=1 // pred_region
      %43 = dma.done [#allocation4], 1024
    $region37: #{tpu_custom_call.1} parent=1 // pred_fallthru
      _
    %v44 = vld [vmem:[#allocation3] sm:$0xff]
    %v45 = vld [vmem:[#allocation3 + $0x8] sm:$0xff]
    %v46 = vld [vmem:[#allocation3 + $0x10] sm:$0xff]
    %v47 = vld [vmem:[#allocation3 + $0x18] sm:$0xff]
    %v48 = vld [vmem:[#allocation3 + $0x20] sm:$0xff]
    %v49 = vld [vmem:[#allocation3 + $0x28] sm:$0xff]
    %v50 = vld [vmem:[#allocation3 + $0x30] sm:$0xff]
    %v51 = vld [vmem:[#allocation3 + $0x38] sm:$0xff]
    %v52 = vld [vmem:[%s1] sm:$0xff]
    %v53 = vld [vmem:[%s2] sm:$0xff]
    %55 = vset.pattern.permute.xlu0 0
    %56 = vperm.xlu0 %55, %v53
    %v57 = vpop.permute.xlu0 %56
    %vm59 = vcmask 130048
    %v61 = vsel %vm59, %v52, 0
    %63 = vmatprep.subr.mxu0 0.0
    %64 = vmatpush1.msra.mxu0 0.0
    %65 = vmatprep.subr.mxu0 0.0
    %66 = vmatpush1.msra.mxu0 0.0
    %67 = vmatprep.subr.mxu0 0.0
    %68 = vmatpush1.msra.mxu0 0.0
    %69 = vmatprep.subr.mxu0 0.0
    %70 = vmatpush1.msra.mxu0 0.0
    %71 = vmatprep.subr.mxu0 0.0
    %72 = vmatpush1.msra.mxu0 0.0
    %73 = vmatprep.subr.mxu0 0.0
    %74 = vmatpush1.msra.mxu0 0.0
    %75 = vmatprep.subr.mxu0 0.0
    %76 = vmatpush1.msra.mxu0 0.0
    %77 = vmatprep.subr.mxu0 0.0
    %78 = vmatpush1.msra.mxu0 0.0
    %79 = vmatprep.subr.mxu0 0.0
    %80 = vmatpush1.msra.mxu0 0.0
    %81 = vmatprep.subr.mxu0 0.0
    %82 = vmatpush1.msra.mxu0 0.0
    %83 = vmatprep.subr.mxu0 0.0
    %84 = vmatpush1.msra.mxu0 0.0
    %85 = vmatprep.subr.mxu0 0.0
    %86 = vmatpush1.msra.mxu0 0.0
    %87 = vmatprep.subr.mxu0 0.0
    %88 = vmatpush1.msra.mxu0 0.0
    %89 = vmatprep.subr.mxu0 0.0
    %90 = vmatpush1.msra.mxu0 0.0
    %91 = vmatprep.subr.mxu0 %v49
    %92 = vmatpush1.msra.mxu0 %v48
    %93 = vmatprep.subr.mxu0 %v45
    %94 = vmatpush1.msra.mxu0 %v44
    %95 = vmatprep.subr.mxu0 0.0
    %96 = vmatpush2.msra.mxu0 0.0
    %97 = vmatprep.subr.mxu0 0.0
    %98 = vmatpush2.msra.mxu0 0.0
    %99 = vmatprep.subr.mxu0 0.0
    %100 = vmatpush2.msra.mxu0 0.0
    %101 = vmatprep.subr.mxu0 0.0
    %102 = vmatpush2.msra.mxu0 0.0
    %103 = vmatprep.subr.mxu0 0.0
    %104 = vmatpush2.msra.mxu0 0.0
    %105 = vmatprep.subr.mxu0 0.0
    %106 = vmatpush2.msra.mxu0 0.0
    %107 = vmatprep.subr.mxu0 0.0
    %108 = vmatpush2.msra.mxu0 0.0
    %109 = vmatprep.subr.mxu0 0.0
    %110 = vmatpush2.msra.mxu0 0.0
    %111 = vmatprep.subr.mxu0 0.0
    %112 = vmatpush2.msra.mxu0 0.0
    %113 = vmatprep.subr.mxu0 0.0
    %114 = vmatpush2.msra.mxu0 0.0
    %115 = vmatprep.subr.mxu0 0.0
    %116 = vmatpush2.msra.mxu0 0.0
    %117 = vmatprep.subr.mxu0 0.0
    %118 = vmatpush2.msra.mxu0 0.0
    %119 = vmatprep.subr.mxu0 0.0
    %120 = vmatpush2.msra.mxu0 0.0
    %121 = vmatprep.subr.mxu0 0.0
    %122 = vmatpush2.msra.mxu0 0.0
    %123 = vmatprep.subr.mxu0 0.0
    %124 = vmatpush2.msra.mxu0 0.0
    %125 = vmatprep.subr.mxu0 0.0
    %126 = vmatpush2.msra.mxu0 0.0
    %127 = vmatprep.mubr.f32.mxu0 0.0
    %128 = vmatmul.mubr.f32.gmra.mxu0 %v61
    %v129 = vpop.f32.mrf.mxu0
    %v130 = vadd.f32 %v57, %v129
    %v131 = vpop.f32.mrf.mxu0
    %v132 = vadd.f32 %v57, %v131
    %133 = vdwg.mxu0
    %134 = vmatprep.subr.mxu0 0.0
    %135 = vmatpush1.msra.mxu0 0.0
    %136 = vmatprep.subr.mxu0 0.0
    %137 = vmatpush1.msra.mxu0 0.0
    %138 = vmatprep.subr.mxu0 0.0
    %139 = vmatpush1.msra.mxu0 0.0
    %140 = vmatprep.subr.mxu0 0.0
    %141 = vmatpush1.msra.mxu0 0.0
    %142 = vmatprep.subr.mxu0 0.0
    %143 = vmatpush1.msra.mxu0 0.0
    %144 = vmatprep.subr.mxu0 0.0
    %145 = vmatpush1.msra.mxu0 0.0
    %146 = vmatprep.subr.mxu0 0.0
    %147 = vmatpush1.msra.mxu0 0.0
    %148 = vmatprep.subr.mxu0 0.0
    %149 = vmatpush1.msra.mxu0 0.0
    %150 = vmatprep.subr.mxu0 0.0
    %151 = vmatpush1.msra.mxu0 0.0
    %152 = vmatprep.subr.mxu0 0.0
    %153 = vmatpush1.msra.mxu0 0.0
    %154 = vmatprep.subr.mxu0 0.0
    %155 = vmatpush1.msra.mxu0 0.0
    %156 = vmatprep.subr.mxu0 0.0
    %157 = vmatpush1.msra.mxu0 0.0
    %158 = vmatprep.subr.mxu0 0.0
    %159 = vmatpush1.msra.mxu0 0.0
    %160 = vmatprep.subr.mxu0 0.0
    %161 = vmatpush1.msra.mxu0 0.0
    %162 = vmatprep.subr.mxu0 %v51
    %163 = vmatpush1.msra.mxu0 %v50
    %164 = vmatprep.subr.mxu0 %v47
    %165 = vmatpush1.msra.mxu0 %v46
    %166 = vmatprep.subr.mxu0 0.0
    %167 = vmatpush2.msra.mxu0 0.0
    %168 = vmatprep.subr.mxu0 0.0
    %169 = vmatpush2.msra.mxu0 0.0
    %170 = vmatprep.subr.mxu0 0.0
    %171 = vmatpush2.msra.mxu0 0.0
    %172 = vmatprep.subr.mxu0 0.0
    %173 = vmatpush2.msra.mxu0 0.0
    %174 = vmatprep.subr.mxu0 0.0
    %175 = vmatpush2.msra.mxu0 0.0
    %176 = vmatprep.subr.mxu0 0.0
    %177 = vmatpush2.msra.mxu0 0.0
    %178 = vmatprep.subr.mxu0 0.0
    %179 = vmatpush2.msra.mxu0 0.0
    %180 = vmatprep.subr.mxu0 0.0
    %181 = vmatpush2.msra.mxu0 0.0
    %182 = vmatprep.subr.mxu0 0.0
    %183 = vmatpush2.msra.mxu0 0.0
    %184 = vmatprep.subr.mxu0 0.0
    %185 = vmatpush2.msra.mxu0 0.0
    %186 = vmatprep.subr.mxu0 0.0
    %187 = vmatpush2.msra.mxu0 0.0
    %188 = vmatprep.subr.mxu0 0.0
    %189 = vmatpush2.msra.mxu0 0.0
    %190 = vmatprep.subr.mxu0 0.0
    %191 = vmatpush2.msra.mxu0 0.0
    %192 = vmatprep.subr.mxu0 0.0
    %193 = vmatpush2.msra.mxu0 0.0
    %194 = vmatprep.subr.mxu0 0.0
    %195 = vmatpush2.msra.mxu0 0.0
    %196 = vmatprep.subr.mxu0 0.0
    %197 = vmatpush2.msra.mxu0 0.0
    %198 = vmatprep.mubr.f32.mxu0 0.0
    %199 = vmatmul.mubr.f32.gmra.mxu0 %v61
    %v200 = vpop.f32.mrf.mxu0
    %v201 = vadd.f32 %v57, %v200
    %v202 = vpop.f32.mrf.mxu0
    %v203 = vadd.f32 %v57, %v202
    %204 = vdwg.mxu0
    %v205 = vmax.f32 %v130, 0.0
    %v206 = vmax.f32 %v132, 0.0
    %v207 = vmax.f32 %v201, 0.0
    %v208 = vmax.f32 %v203, 0.0
    %209 = vrot.lane.b32.xlu0 %v205, 17
    %v210 = vpop.permute.xlu0 %209
    %211 = vrot.lane.b32.xlu0 %v206, 17
    %v212 = vpop.permute.xlu0 %211
    %213 = vrot.lane.b32.xlu0 %v207, 17
    %v214 = vpop.permute.xlu0 %213
    %215 = vrot.lane.b32.xlu0 %v208, 17
    %v216 = vpop.permute.xlu0 %215
    %v217 = vlaneseq
    %v218 = vand.u32 %v217, 127
    %vm219 = vcmp.lt.s32.totalorder %v218, 17
    %v220 = vsel %vm219, %v214, %v216
    %v221 = vsel %vm219, %v212, %v214
    %v222 = vsel %vm219, %v210, %v212
    %v223 = vsel %vm219, %v216, %v210
    %v224 = vld [vmem:[%s4] sm:$0xf]
    %v226 = vlaneseq
    %v227 = vshrl.u32 %v226, 7
    %v228 = vsub.s32 0, %v227
    %v229 = vrot.slane %v224, %v228
    %v230 = vlaneseq
    %v231 = vshrl.u32 %v230, 7
    %v232 = vsub.s32 1, %v231
    %v233 = vrot.slane %v224, %v232
    %v234 = vlaneseq
    %v235 = vshrl.u32 %v234, 7
    %v236 = vsub.s32 2, %v235
    %v237 = vrot.slane %v224, %v236
    %v238 = vlaneseq
    %v239 = vshrl.u32 %v238, 7
    %v240 = vsub.s32 3, %v239
    %v241 = vrot.slane %v224, %v240
    %v246 = vmul.f32 %v223, %v229
    %v247 = vmul.f32 %v222, %v233
    %v248 = vmul.f32 %v221, %v237
    %v249 = vmul.f32 %v220, %v241
    %250 = vst [vmem:[#allocation2] sm:$0xff] %v246
    %251 = vst [vmem:[#allocation2 + $0x8] sm:$0xff] %v247
    %252 = vst [vmem:[#allocation2 + $0x10] sm:$0xff] %v248
    %253 = vst [vmem:[#allocation2 + $0x18] sm:$0xff] %v249
    %254 = vrot.lane.b32.xlu0 %v205, 16
    %v255 = vpop.permute.xlu0 %254
    %256 = vrot.lane.b32.xlu0 %v206, 16
    %v257 = vpop.permute.xlu0 %256
    %258 = vrot.lane.b32.xlu0 %v207, 16
    %v259 = vpop.permute.xlu0 %258
    %260 = vrot.lane.b32.xlu0 %v208, 16
    %v261 = vpop.permute.xlu0 %260
    %vm262 = vcmp.lt.s32.totalorder %v218, 16
    %v263 = vsel %vm262, %v259, %v261
    %v264 = vsel %vm262, %v257, %v259
    %v265 = vsel %vm262, %v255, %v257
    %v266 = vsel %vm262, %v261, %v255
    %s267 = scalar_lea.vmem %s4, 4
    %v268 = vld [vmem:[%s267] sm:$0xf]
    %v270 = vlaneseq
    %v271 = vshrl.u32 %v270, 7
    %v272 = vsub.s32 0, %v271
    %v273 = vrot.slane %v268, %v272
    %v274 = vlaneseq
    %v275 = vshrl.u32 %v274, 7
    %v276 = vsub.s32 1, %v275
    %v277 = vrot.slane %v268, %v276
    %v278 = vlaneseq
    %v279 = vshrl.u32 %v278, 7
    %v280 = vsub.s32 2, %v279
    %v281 = vrot.slane %v268, %v280
    %v282 = vlaneseq
    %v283 = vshrl.u32 %v282, 7
    %v284 = vsub.s32 3, %v283
    %v285 = vrot.slane %v268, %v284
    %v290 = vmul.f32 %v266, %v273
    %v291 = vmul.f32 %v265, %v277
    %v292 = vmul.f32 %v264, %v281
    %v293 = vmul.f32 %v263, %v285
    %294 = vst [vmem:[#allocation2 + $0x20] sm:$0xff] %v290
    %295 = vst [vmem:[#allocation2 + $0x28] sm:$0xff] %v291
    %296 = vst [vmem:[#allocation2 + $0x30] sm:$0xff] %v292
    %297 = vst [vmem:[#allocation2 + $0x38] sm:$0xff] %v293
    %298 = vrot.lane.b32.xlu0 %v205, 15
    %v299 = vpop.permute.xlu0 %298
    %300 = vrot.lane.b32.xlu0 %v206, 15
    %v301 = vpop.permute.xlu0 %300
    %302 = vrot.lane.b32.xlu0 %v207, 15
    %v303 = vpop.permute.xlu0 %302
    %304 = vrot.lane.b32.xlu0 %v208, 15
    %v305 = vpop.permute.xlu0 %304
    %vm306 = vcmp.lt.s32.totalorder %v218, 15
    %v307 = vsel %vm306, %v303, %v305
    %v308 = vsel %vm306, %v301, %v303
    %v309 = vsel %vm306, %v299, %v301
    %v310 = vsel %vm306, %v305, %v299
    %s311 = scalar_lea.vmem %s4, 8
    %v312 = vld [vmem:[%s311] sm:$0xf]
    %v314 = vlaneseq
    %v315 = vshrl.u32 %v314, 7
    %v316 = vsub.s32 0, %v315
    %v317 = vrot.slane %v312, %v316
    %v318 = vlaneseq
    %v319 = vshrl.u32 %v318, 7
    %v320 = vsub.s32 1, %v319
    %v321 = vrot.slane %v312, %v320
    %v322 = vlaneseq
    %v323 = vshrl.u32 %v322, 7
    %v324 = vsub.s32 2, %v323
    %v325 = vrot.slane %v312, %v324
    %v326 = vlaneseq
    %v327 = vshrl.u32 %v326, 7
    %v328 = vsub.s32 3, %v327
    %v329 = vrot.slane %v312, %v328
    %v334 = vmul.f32 %v310, %v317
    %v335 = vmul.f32 %v309, %v321
    %v336 = vmul.f32 %v308, %v325
    %v337 = vmul.f32 %v307, %v329
    %338 = vst [vmem:[#allocation2 + $0x40] sm:$0xff] %v334
    %339 = vst [vmem:[#allocation2 + $0x48] sm:$0xff] %v335
    %340 = vst [vmem:[#allocation2 + $0x50] sm:$0xff] %v336
    %341 = vst [vmem:[#allocation2 + $0x58] sm:$0xff] %v337
    %342 = vrot.lane.b32.xlu0 %v205, 1
    %v343 = vpop.permute.xlu0 %342
    %344 = vrot.lane.b32.xlu0 %v206, 1
    %v345 = vpop.permute.xlu0 %344
    %346 = vrot.lane.b32.xlu0 %v207, 1
    %v347 = vpop.permute.xlu0 %346
    %348 = vrot.lane.b32.xlu0 %v208, 1
    %v349 = vpop.permute.xlu0 %348
    %vm350 = vcmp.lt.s32.totalorder %v218, 1
    %v351 = vsel %vm350, %v347, %v349
    %v352 = vsel %vm350, %v345, %v347
    %v353 = vsel %vm350, %v343, %v345
    %v354 = vsel %vm350, %v349, %v343
    %s355 = scalar_lea.vmem %s4, 12
    %v356 = vld [vmem:[%s355] sm:$0xf]
    %v358 = vlaneseq
    %v359 = vshrl.u32 %v358, 7
    %v360 = vsub.s32 0, %v359
    %v361 = vrot.slane %v356, %v360
    %v362 = vlaneseq
    %v363 = vshrl.u32 %v362, 7
    %v364 = vsub.s32 1, %v363
    %v365 = vrot.slane %v356, %v364
    %v366 = vlaneseq
    %v367 = vshrl.u32 %v366, 7
    %v368 = vsub.s32 2, %v367
    %v369 = vrot.slane %v356, %v368
    %v370 = vlaneseq
    %v371 = vshrl.u32 %v370, 7
    %v372 = vsub.s32 3, %v371
    %v373 = vrot.slane %v356, %v372
    %v378 = vmul.f32 %v354, %v361
    %v379 = vmul.f32 %v353, %v365
    %v380 = vmul.f32 %v352, %v369
    %v381 = vmul.f32 %v351, %v373
    %382 = vst [vmem:[#allocation2 + $0x60] sm:$0xff] %v378
    %383 = vst [vmem:[#allocation2 + $0x68] sm:$0xff] %v379
    %384 = vst [vmem:[#allocation2 + $0x70] sm:$0xff] %v380
    %385 = vst [vmem:[#allocation2 + $0x78] sm:$0xff] %v381
    %386 = vst [vmem:[#allocation2 + $0x80] sm:$0xff] %v205
    %387 = vst [vmem:[#allocation2 + $0x88] sm:$0xff] %v206
    %388 = vst [vmem:[#allocation2 + $0x90] sm:$0xff] %v207
    %389 = vst [vmem:[#allocation2 + $0x98] sm:$0xff] %v208
    %390 = vrot.lane.b32.xlu0 %v205, 127
    %v391 = vpop.permute.xlu0 %390
    %392 = vrot.lane.b32.xlu0 %v206, 127
    %v393 = vpop.permute.xlu0 %392
    %394 = vrot.lane.b32.xlu0 %v207, 127
    %v395 = vpop.permute.xlu0 %394
    %396 = vrot.lane.b32.xlu0 %v208, 127
    %v397 = vpop.permute.xlu0 %396
    %vm398 = vcmp.lt.s32.totalorder %v218, 127
    %v399 = vsel %vm398, %v395, %v397
    %v400 = vsel %vm398, %v393, %v395
    %v401 = vsel %vm398, %v391, %v393
    %v402 = vsel %vm398, %v397, %v391
    %s403 = scalar_lea.vmem %s4, 20
    %v404 = vld [vmem:[%s403] sm:$0xf]
    %v406 = vlaneseq
    %v407 = vshrl.u32 %v406, 7
    %v408 = vsub.s32 0, %v407
    %v409 = vrot.slane %v404, %v408
    %v410 = vlaneseq
    %v411 = vshrl.u32 %v410, 7
    %v412 = vsub.s32 1, %v411
    %v413 = vrot.slane %v404, %v412
    %v414 = vlaneseq
    %v415 = vshrl.u32 %v414, 7
    %v416 = vsub.s32 2, %v415
    %v417 = vrot.slane %v404, %v416
    %v418 = vlaneseq
    %v419 = vshrl.u32 %v418, 7
    %v420 = vsub.s32 3, %v419
    %v421 = vrot.slane %v404, %v420
    %v426 = vmul.f32 %v401, %v409
    %v427 = vmul.f32 %v400, %v413
    %v428 = vmul.f32 %v399, %v417
    %v429 = vmul.f32 %v402, %v421
    %430 = vst [vmem:[#allocation2 + $0xa0] sm:$0xff] %v426
    %431 = vst [vmem:[#allocation2 + $0xa8] sm:$0xff] %v427
    %432 = vst [vmem:[#allocation2 + $0xb0] sm:$0xff] %v428
    %433 = vst [vmem:[#allocation2 + $0xb8] sm:$0xff] %v429
    %434 = vrot.lane.b32.xlu0 %v205, 113
    %v435 = vpop.permute.xlu0 %434
    %436 = vrot.lane.b32.xlu0 %v206, 113
    %v437 = vpop.permute.xlu0 %436
    %438 = vrot.lane.b32.xlu0 %v207, 113
    %v439 = vpop.permute.xlu0 %438
    %440 = vrot.lane.b32.xlu0 %v208, 113
    %v441 = vpop.permute.xlu0 %440
    %vm442 = vcmp.lt.s32.totalorder %v218, 113
    %v443 = vsel %vm442, %v439, %v441
    %v444 = vsel %vm442, %v437, %v439
    %v445 = vsel %vm442, %v435, %v437
    %v446 = vsel %vm442, %v441, %v435
    %s447 = scalar_lea.vmem %s4, 24
    %v448 = vld [vmem:[%s447] sm:$0xf]
    %v450 = vlaneseq
    %v451 = vshrl.u32 %v450, 7
    %v452 = vsub.s32 0, %v451
    %v453 = vrot.slane %v448, %v452
    %v454 = vlaneseq
    %v455 = vshrl.u32 %v454, 7
    %v456 = vsub.s32 1, %v455
    %v457 = vrot.slane %v448, %v456
    %v458 = vlaneseq
    %v459 = vshrl.u32 %v458, 7
    %v460 = vsub.s32 2, %v459
    %v461 = vrot.slane %v448, %v460
    %v462 = vlaneseq
    %v463 = vshrl.u32 %v462, 7
    %v464 = vsub.s32 3, %v463
    %v465 = vrot.slane %v448, %v464
    %v470 = vmul.f32 %v445, %v453
    %v471 = vmul.f32 %v444, %v457
    %v472 = vmul.f32 %v443, %v461
    %v473 = vmul.f32 %v446, %v465
    %474 = vst [vmem:[#allocation2 + $0xc0] sm:$0xff] %v470
    %475 = vst [vmem:[#allocation2 + $0xc8] sm:$0xff] %v471
    %476 = vst [vmem:[#allocation2 + $0xd0] sm:$0xff] %v472
    %477 = vst [vmem:[#allocation2 + $0xd8] sm:$0xff] %v473
    %478 = vrot.lane.b32.xlu0 %v205, 112
    %v479 = vpop.permute.xlu0 %478
    %480 = vrot.lane.b32.xlu0 %v206, 112
    %v481 = vpop.permute.xlu0 %480
    %482 = vrot.lane.b32.xlu0 %v207, 112
    %v483 = vpop.permute.xlu0 %482
    %484 = vrot.lane.b32.xlu0 %v208, 112
    %v485 = vpop.permute.xlu0 %484
    %vm486 = vcmp.lt.s32.totalorder %v218, 112
    %v487 = vsel %vm486, %v483, %v485
    %v488 = vsel %vm486, %v481, %v483
    %v489 = vsel %vm486, %v479, %v481
    %v490 = vsel %vm486, %v485, %v479
    %s491 = scalar_lea.vmem %s4, 28
    %v492 = vld [vmem:[%s491] sm:$0xf]
    %v494 = vlaneseq
    %v495 = vshrl.u32 %v494, 7
    %v496 = vsub.s32 0, %v495
    %v497 = vrot.slane %v492, %v496
    %v498 = vlaneseq
    %v499 = vshrl.u32 %v498, 7
    %v500 = vsub.s32 1, %v499
    %v501 = vrot.slane %v492, %v500
    %v502 = vlaneseq
    %v503 = vshrl.u32 %v502, 7
    %v504 = vsub.s32 2, %v503
    %v505 = vrot.slane %v492, %v504
    %v506 = vlaneseq
    %v507 = vshrl.u32 %v506, 7
    %v508 = vsub.s32 3, %v507
    %v509 = vrot.slane %v492, %v508
    %v514 = vmul.f32 %v489, %v497
    %v515 = vmul.f32 %v488, %v501
    %v516 = vmul.f32 %v487, %v505
    %v517 = vmul.f32 %v490, %v509
    %518 = vst [vmem:[#allocation2 + $0xe0] sm:$0xff] %v514
    %519 = vst [vmem:[#allocation2 + $0xe8] sm:$0xff] %v515
    %520 = vst [vmem:[#allocation2 + $0xf0] sm:$0xff] %v516
    %521 = vst [vmem:[#allocation2 + $0xf8] sm:$0xff] %v517
    %522 = vrot.lane.b32.xlu0 %v205, 111
    %v523 = vpop.permute.xlu0 %522
    %524 = vrot.lane.b32.xlu0 %v206, 111
    %v525 = vpop.permute.xlu0 %524
    %526 = vrot.lane.b32.xlu0 %v207, 111
    %v527 = vpop.permute.xlu0 %526
    %528 = vrot.lane.b32.xlu0 %v208, 111
    %v529 = vpop.permute.xlu0 %528
    %vm530 = vcmp.lt.s32.totalorder %v218, 111
    %v531 = vsel %vm530, %v527, %v529
    %v532 = vsel %vm530, %v525, %v527
    %v533 = vsel %vm530, %v523, %v525
    %v534 = vsel %vm530, %v529, %v523
    %s535 = scalar_lea.vmem %s4, 32
    %v536 = vld [vmem:[%s535] sm:$0xf]
    %v538 = vlaneseq
    %v539 = vshrl.u32 %v538, 7
    %v540 = vsub.s32 0, %v539
    %v541 = vrot.slane %v536, %v540
    %v542 = vlaneseq
    %v543 = vshrl.u32 %v542, 7
    %v544 = vsub.s32 1, %v543
    %v545 = vrot.slane %v536, %v544
    %v546 = vlaneseq
    %v547 = vshrl.u32 %v546, 7
    %v548 = vsub.s32 2, %v547
    %v549 = vrot.slane %v536, %v548
    %v550 = vlaneseq
    %v551 = vshrl.u32 %v550, 7
    %v552 = vsub.s32 3, %v551
    %v553 = vrot.slane %v536, %v552
    %v558 = vmul.f32 %v533, %v541
    %v559 = vmul.f32 %v532, %v545
    %v560 = vmul.f32 %v531, %v549
    %v561 = vmul.f32 %v534, %v553
    %562 = vst [vmem:[#allocation2 + $0x100] sm:$0xff] %v558
    %563 = vst [vmem:[#allocation2 + $0x108] sm:$0xff] %v559
    %564 = vst [vmem:[#allocation2 + $0x110] sm:$0xff] %v560
    %565 = vst [vmem:[#allocation2 + $0x118] sm:$0xff] %v561
    %v566 = vld [vmem:[%s3] sm:$0xff]
    %v567 = vld [vmem:[#allocation2] sm:$0xff]
    %v568 = vld [vmem:[#allocation2 + $0x8] sm:$0xff]
    %v569 = vld [vmem:[#allocation2 + $0x10] sm:$0xff]
    %v570 = vld [vmem:[#allocation2 + $0x18] sm:$0xff]
    %v571 = vld [vmem:[#allocation2 + $0x20] sm:$0xff]
    %v572 = vld [vmem:[#allocation2 + $0x28] sm:$0xff]
    %v573 = vld [vmem:[#allocation2 + $0x30] sm:$0xff]
    %v574 = vld [vmem:[#allocation2 + $0x38] sm:$0xff]
    %v575 = vld [vmem:[#allocation2 + $0x40] sm:$0xff]
    %v576 = vld [vmem:[#allocation2 + $0x48] sm:$0xff]
    %v577 = vld [vmem:[#allocation2 + $0x50] sm:$0xff]
    %v578 = vld [vmem:[#allocation2 + $0x58] sm:$0xff]
    %v579 = vld [vmem:[#allocation2 + $0x60] sm:$0xff]
    %v580 = vld [vmem:[#allocation2 + $0x68] sm:$0xff]
    %v581 = vld [vmem:[#allocation2 + $0x70] sm:$0xff]
    %v582 = vld [vmem:[#allocation2 + $0x78] sm:$0xff]
    %v583 = vld [vmem:[#allocation2 + $0x80] sm:$0xff]
    %v584 = vld [vmem:[#allocation2 + $0x88] sm:$0xff]
    %v585 = vld [vmem:[#allocation2 + $0x90] sm:$0xff]
    %v586 = vld [vmem:[#allocation2 + $0x98] sm:$0xff]
    %v587 = vld [vmem:[#allocation2 + $0xa0] sm:$0xff]
    %v588 = vld [vmem:[#allocation2 + $0xa8] sm:$0xff]
    %v589 = vld [vmem:[#allocation2 + $0xb0] sm:$0xff]
    %v590 = vld [vmem:[#allocation2 + $0xb8] sm:$0xff]
    %v591 = vld [vmem:[#allocation2 + $0xc0] sm:$0xff]
    %v592 = vld [vmem:[#allocation2 + $0xc8] sm:$0xff]
    %v593 = vld [vmem:[#allocation2 + $0xd0] sm:$0xff]
    %v594 = vld [vmem:[#allocation2 + $0xd8] sm:$0xff]
    %v595 = vld [vmem:[#allocation2 + $0xe0] sm:$0xff]
    %v596 = vld [vmem:[#allocation2 + $0xe8] sm:$0xff]
    %v597 = vld [vmem:[#allocation2 + $0xf0] sm:$0xff]
    %v598 = vld [vmem:[#allocation2 + $0xf8] sm:$0xff]
    %v599 = vld [vmem:[#allocation2 + $0x100] sm:$0xff]
    %v600 = vld [vmem:[#allocation2 + $0x108] sm:$0xff]
    %v601 = vld [vmem:[#allocation2 + $0x110] sm:$0xff]
    %v602 = vld [vmem:[#allocation2 + $0x118] sm:$0xff]
    %v603 = vld [vmem:[%s5] sm:$0xff]
    %605 = vset.pattern.permute.xlu0 0
    %606 = vperm.xlu0 %605, %v603
    %v607 = vpop.permute.xlu0 %606
    %vm609 = vcmask 588800
    %v611 = vsel %vm609, %v566, 0
    %613 = vmatprep.subr.mxu0 0.0
    %614 = vmatpush1.msra.mxu0 0.0
    %615 = vmatprep.subr.mxu0 0.0
    %616 = vmatpush1.msra.mxu0 0.0
    %617 = vmatprep.subr.mxu0 0.0
    %618 = vmatpush1.msra.mxu0 0.0
    %619 = vmatprep.subr.mxu0 0.0
    %620 = vmatpush1.msra.mxu0 0.0
    %621 = vmatprep.subr.mxu0 0.0
    %622 = vmatpush1.msra.mxu0 0.0
    %623 = vmatprep.subr.mxu0 0.0
    %624 = vmatpush1.msra.mxu0 0.0
    %625 = vmatprep.subr.mxu0 0.0
    %626 = vmatpush1.msra.mxu0 0.0
    %627 = vmatprep.subr.mxu0 %v600
    %628 = vmatpush1.msra.mxu0 %v599
    %629 = vmatprep.subr.mxu0 %v596
    %630 = vmatpush1.msra.mxu0 %v595
    %631 = vmatprep.subr.mxu0 %v592
    %632 = vmatpush1.msra.mxu0 %v591
    %633 = vmatprep.subr.mxu0 %v588
    %634 = vmatpush1.msra.mxu0 %v587
    %635 = vmatprep.subr.mxu0 %v584
    %636 = vmatpush1.msra.mxu0 %v583
    %637 = vmatprep.subr.mxu0 %v580
    %638 = vmatpush1.msra.mxu0 %v579
    %639 = vmatprep.subr.mxu0 %v576
    %640 = vmatpush1.msra.mxu0 %v575
    %641 = vmatprep.subr.mxu0 %v572
    %642 = vmatpush1.msra.mxu0 %v571
    %643 = vmatprep.subr.mxu0 %v568
    %644 = vmatpush1.msra.mxu0 %v567
    %645 = vmatprep.subr.mxu0 0.0
    %646 = vmatpush2.msra.mxu0 0.0
    %647 = vmatprep.subr.mxu0 0.0
    %648 = vmatpush2.msra.mxu0 0.0
    %649 = vmatprep.subr.mxu0 0.0
    %650 = vmatpush2.msra.mxu0 0.0
    %651 = vmatprep.subr.mxu0 0.0
    %652 = vmatpush2.msra.mxu0 0.0
    %653 = vmatprep.subr.mxu0 0.0
    %654 = vmatpush2.msra.mxu0 0.0
    %655 = vmatprep.subr.mxu0 0.0
    %656 = vmatpush2.msra.mxu0 0.0
    %657 = vmatprep.subr.mxu0 0.0
    %658 = vmatpush2.msra.mxu0 0.0
    %659 = vmatprep.subr.mxu0 0.0
    %660 = vmatpush2.msra.mxu0 0.0
    %661 = vmatprep.subr.mxu0 0.0
    %662 = vmatpush2.msra.mxu0 0.0
    %663 = vmatprep.subr.mxu0 0.0
    %664 = vmatpush2.msra.mxu0 0.0
    %665 = vmatprep.subr.mxu0 0.0
    %666 = vmatpush2.msra.mxu0 0.0
    %667 = vmatprep.subr.mxu0 0.0
    %668 = vmatpush2.msra.mxu0 0.0
    %669 = vmatprep.subr.mxu0 0.0
    %670 = vmatpush2.msra.mxu0 0.0
    %671 = vmatprep.subr.mxu0 0.0
    %672 = vmatpush2.msra.mxu0 0.0
    %673 = vmatprep.subr.mxu0 0.0
    %674 = vmatpush2.msra.mxu0 0.0
    %675 = vmatprep.subr.mxu0 0.0
    %676 = vmatpush2.msra.mxu0 0.0
    %677 = vmatprep.mubr.f32.mxu0 0.0
    %678 = vmatmul.mubr.f32.gmra.mxu0 %v611
    %v679 = vpop.f32.mrf.mxu0
    %v680 = vadd.f32 %v607, %v679
    %v681 = vpop.f32.mrf.mxu0
    %v682 = vadd.f32 %v607, %v681
    %683 = vdwg.mxu0
    %684 = vmatprep.subr.mxu0 0.0
    %685 = vmatpush1.msra.mxu0 0.0
    %686 = vmatprep.subr.mxu0 0.0
    %687 = vmatpush1.msra.mxu0 0.0
    %688 = vmatprep.subr.mxu0 0.0
    %689 = vmatpush1.msra.mxu0 0.0
    %690 = vmatprep.subr.mxu0 0.0
    %691 = vmatpush1.msra.mxu0 0.0
    %692 = vmatprep.subr.mxu0 0.0
    %693 = vmatpush1.msra.mxu0 0.0
    %694 = vmatprep.subr.mxu0 0.0
    %695 = vmatpush1.msra.mxu0 0.0
    %696 = vmatprep.subr.mxu0 0.0
    %697 = vmatpush1.msra.mxu0 0.0
    %698 = vmatprep.subr.mxu0 %v602
    %699 = vmatpush1.msra.mxu0 %v601
    %700 = vmatprep.subr.mxu0 %v598
    %701 = vmatpush1.msra.mxu0 %v597
    %702 = vmatprep.subr.mxu0 %v594
    %703 = vmatpush1.msra.mxu0 %v593
    %704 = vmatprep.subr.mxu0 %v590
    %705 = vmatpush1.msra.mxu0 %v589
    %706 = vmatprep.subr.mxu0 %v586
    %707 = vmatpush1.msra.mxu0 %v585
    %708 = vmatprep.subr.mxu0 %v582
    %709 = vmatpush1.msra.mxu0 %v581
    %710 = vmatprep.subr.mxu0 %v578
    %711 = vmatpush1.msra.mxu0 %v577
    %712 = vmatprep.subr.mxu0 %v574
    %713 = vmatpush1.msra.mxu0 %v573
    %714 = vmatprep.subr.mxu0 %v570
    %715 = vmatpush1.msra.mxu0 %v569
    %716 = vmatprep.subr.mxu0 0.0
    %717 = vmatpush2.msra.mxu0 0.0
    %718 = vmatprep.subr.mxu0 0.0
    %719 = vmatpush2.msra.mxu0 0.0
    %720 = vmatprep.subr.mxu0 0.0
    %721 = vmatpush2.msra.mxu0 0.0
    %722 = vmatprep.subr.mxu0 0.0
    %723 = vmatpush2.msra.mxu0 0.0
    %724 = vmatprep.subr.mxu0 0.0
    %725 = vmatpush2.msra.mxu0 0.0
    %726 = vmatprep.subr.mxu0 0.0
    %727 = vmatpush2.msra.mxu0 0.0
    %728 = vmatprep.subr.mxu0 0.0
    %729 = vmatpush2.msra.mxu0 0.0
    %730 = vmatprep.subr.mxu0 0.0
    %731 = vmatpush2.msra.mxu0 0.0
    %732 = vmatprep.subr.mxu0 0.0
    %733 = vmatpush2.msra.mxu0 0.0
    %734 = vmatprep.subr.mxu0 0.0
    %735 = vmatpush2.msra.mxu0 0.0
    %736 = vmatprep.subr.mxu0 0.0
    %737 = vmatpush2.msra.mxu0 0.0
    %738 = vmatprep.subr.mxu0 0.0
    %739 = vmatpush2.msra.mxu0 0.0
    %740 = vmatprep.subr.mxu0 0.0
    %741 = vmatpush2.msra.mxu0 0.0
    %742 = vmatprep.subr.mxu0 0.0
    %743 = vmatpush2.msra.mxu0 0.0
    %744 = vmatprep.subr.mxu0 0.0
    %745 = vmatpush2.msra.mxu0 0.0
    %746 = vmatprep.subr.mxu0 0.0
    %747 = vmatpush2.msra.mxu0 0.0
    %748 = vmatprep.mubr.f32.mxu0 0.0
    %749 = vmatmul.mubr.f32.gmra.mxu0 %v611
    %v750 = vpop.f32.mrf.mxu0
    %v751 = vadd.f32 %v607, %v750
    %v752 = vpop.f32.mrf.mxu0
    %v753 = vadd.f32 %v607, %v752
    %754 = vdwg.mxu0
    %v755 = vmax.f32 %v680, 0.0
    %v756 = vmax.f32 %v682, 0.0
    %v757 = vmax.f32 %v751, 0.0
    %v758 = vmax.f32 %v753, 0.0
    %v759 = vld [vmem:[%s6] sm:$0xff]
    %v760 = vld [vmem:[%s6 + $0x8] sm:$0xff]
    %v761 = vld [vmem:[%s7] sm:$0xff]
    %v762 = vld [vmem:[%s7 + $0x8] sm:$0xff]
    %764 = vset.pattern.permute.xlu0 0
    %765 = vperm.xlu0 %764, %v761
    %v766 = vpop.permute.xlu0 %765
    %769 = vset.pattern.permute.xlu0 0
    %770 = vperm.xlu0 %769, %v762
    %v771 = vpop.permute.xlu0 %770
    %vm773 = vcmask 64512
    %v775 = vsel %vm773, %v759, 0
    %v778 = vsel %vm773, %v760, 0
    %780 = vmatprep.subr.mxu0 0.0
    %781 = vmatpush1.msra.mxu0 0.0
    %782 = vmatprep.subr.mxu0 0.0
    %783 = vmatpush1.msra.mxu0 0.0
    %784 = vmatprep.subr.mxu0 0.0
    %785 = vmatpush1.msra.mxu0 0.0
    %786 = vmatprep.subr.mxu0 0.0
    %787 = vmatpush1.msra.mxu0 0.0
    %788 = vmatprep.subr.mxu0 0.0
    %789 = vmatpush1.msra.mxu0 0.0
    %790 = vmatprep.subr.mxu0 0.0
    %791 = vmatpush1.msra.mxu0 0.0
    %792 = vmatprep.subr.mxu0 0.0
    %793 = vmatpush1.msra.mxu0 0.0
    %794 = vmatprep.subr.mxu0 0.0
    %795 = vmatpush1.msra.mxu0 0.0
    %796 = vmatprep.subr.mxu0 0.0
    %797 = vmatpush1.msra.mxu0 0.0
    %798 = vmatprep.subr.mxu0 0.0
    %799 = vmatpush1.msra.mxu0 0.0
    %800 = vmatprep.subr.mxu0 0.0
    %801 = vmatpush1.msra.mxu0 0.0
    %802 = vmatprep.subr.mxu0 0.0
    %803 = vmatpush1.msra.mxu0 0.0
    %804 = vmatprep.subr.mxu0 0.0
    %805 = vmatpush1.msra.mxu0 0.0
    %806 = vmatprep.subr.mxu0 0.0
    %807 = vmatpush1.msra.mxu0 0.0
    %808 = vmatprep.subr.mxu0 0.0
    %809 = vmatpush1.msra.mxu0 0.0
    %810 = vmatprep.subr.mxu0 %v756
    %811 = vmatpush1.msra.mxu0 %v755
    %812 = vmatprep.subr.mxu0 0.0
    %813 = vmatpush2.msra.mxu0 0.0
    %814 = vmatprep.subr.mxu0 0.0
    %815 = vmatpush2.msra.mxu0 0.0
    %816 = vmatprep.subr.mxu0 0.0
    %817 = vmatpush2.msra.mxu0 0.0
    %818 = vmatprep.subr.mxu0 0.0
    %819 = vmatpush2.msra.mxu0 0.0
    %820 = vmatprep.subr.mxu0 0.0
    %821 = vmatpush2.msra.mxu0 0.0
    %822 = vmatprep.subr.mxu0 0.0
    %823 = vmatpush2.msra.mxu0 0.0
    %824 = vmatprep.subr.mxu0 0.0
    %825 = vmatpush2.msra.mxu0 0.0
    %826 = vmatprep.subr.mxu0 0.0
    %827 = vmatpush2.msra.mxu0 0.0
    %828 = vmatprep.subr.mxu0 0.0
    %829 = vmatpush2.msra.mxu0 0.0
    %830 = vmatprep.subr.mxu0 0.0
    %831 = vmatpush2.msra.mxu0 0.0
    %832 = vmatprep.subr.mxu0 0.0
    %833 = vmatpush2.msra.mxu0 0.0
    %834 = vmatprep.subr.mxu0 0.0
    %835 = vmatpush2.msra.mxu0 0.0
    %836 = vmatprep.subr.mxu0 0.0
    %837 = vmatpush2.msra.mxu0 0.0
    %838 = vmatprep.subr.mxu0 0.0
    %839 = vmatpush2.msra.mxu0 0.0
    %840 = vmatprep.subr.mxu0 0.0
    %841 = vmatpush2.msra.mxu0 0.0
    %842 = vmatprep.subr.mxu0 0.0
    %843 = vmatpush2.msra.mxu0 0.0
    %844 = vmatprep.mubr.f32.mxu0 0.0
    %845 = vmatmul.mubr.f32.gmra.mxu0 %v775
    %v846 = vpop.f32.mrf.mxu0
    %v847 = vadd.f32 %v766, %v846
    %v848 = vpop.f32.mrf.mxu0
    %v849 = vadd.f32 %v766, %v848
    %850 = vmatprep.mubr.f32.mxu0 0.0
    %851 = vmatmul.mubr.f32.gmra.mxu0 %v778
    %v852 = vpop.f32.mrf.mxu0
    %v853 = vadd.f32 %v771, %v852
    %v854 = vpop.f32.mrf.mxu0
    %v855 = vadd.f32 %v771, %v854
    %856 = vdwg.mxu0
    %857 = vmatprep.subr.mxu0 0.0
    %858 = vmatpush1.msra.mxu0 0.0
    %859 = vmatprep.subr.mxu0 0.0
    %860 = vmatpush1.msra.mxu0 0.0
    %861 = vmatprep.subr.mxu0 0.0
    %862 = vmatpush1.msra.mxu0 0.0
    %863 = vmatprep.subr.mxu0 0.0
    %864 = vmatpush1.msra.mxu0 0.0
    %865 = vmatprep.subr.mxu0 0.0
    %866 = vmatpush1.msra.mxu0 0.0
    %867 = vmatprep.subr.mxu0 0.0
    %868 = vmatpush1.msra.mxu0 0.0
    %869 = vmatprep.subr.mxu0 0.0
    %870 = vmatpush1.msra.mxu0 0.0
    %871 = vmatprep.subr.mxu0 0.0
    %872 = vmatpush1.msra.mxu0 0.0
    %873 = vmatprep.subr.mxu0 0.0
    %874 = vmatpush1.msra.mxu0 0.0
    %875 = vmatprep.subr.mxu0 0.0
    %876 = vmatpush1.msra.mxu0 0.0
    %877 = vmatprep.subr.mxu0 0.0
    %878 = vmatpush1.msra.mxu0 0.0
    %879 = vmatprep.subr.mxu0 0.0
    %880 = vmatpush1.msra.mxu0 0.0
    %881 = vmatprep.subr.mxu0 0.0
    %882 = vmatpush1.msra.mxu0 0.0
    %883 = vmatprep.subr.mxu0 0.0
    %884 = vmatpush1.msra.mxu0 0.0
    %885 = vmatprep.subr.mxu0 0.0
    %886 = vmatpush1.msra.mxu0 0.0
    %887 = vmatprep.subr.mxu0 %v758
    %888 = vmatpush1.msra.mxu0 %v757
    %889 = vmatprep.subr.mxu0 0.0
    %890 = vmatpush2.msra.mxu0 0.0
    %891 = vmatprep.subr.mxu0 0.0
    %892 = vmatpush2.msra.mxu0 0.0
    %893 = vmatprep.subr.mxu0 0.0
    %894 = vmatpush2.msra.mxu0 0.0
    %895 = vmatprep.subr.mxu0 0.0
    %896 = vmatpush2.msra.mxu0 0.0
    %897 = vmatprep.subr.mxu0 0.0
    %898 = vmatpush2.msra.mxu0 0.0
    %899 = vmatprep.subr.mxu0 0.0
    %900 = vmatpush2.msra.mxu0 0.0
    %901 = vmatprep.subr.mxu0 0.0
    %902 = vmatpush2.msra.mxu0 0.0
    %903 = vmatprep.subr.mxu0 0.0
    %904 = vmatpush2.msra.mxu0 0.0
    %905 = vmatprep.subr.mxu0 0.0
    %906 = vmatpush2.msra.mxu0 0.0
    %907 = vmatprep.subr.mxu0 0.0
    %908 = vmatpush2.msra.mxu0 0.0
    %909 = vmatprep.subr.mxu0 0.0
    %910 = vmatpush2.msra.mxu0 0.0
    %911 = vmatprep.subr.mxu0 0.0
    %912 = vmatpush2.msra.mxu0 0.0
    %913 = vmatprep.subr.mxu0 0.0
    %914 = vmatpush2.msra.mxu0 0.0
    %915 = vmatprep.subr.mxu0 0.0
    %916 = vmatpush2.msra.mxu0 0.0
    %917 = vmatprep.subr.mxu0 0.0
    %918 = vmatpush2.msra.mxu0 0.0
    %919 = vmatprep.subr.mxu0 0.0
    %920 = vmatpush2.msra.mxu0 0.0
    %921 = vmatprep.mubr.f32.mxu0 0.0
    %922 = vmatmul.mubr.f32.gmra.mxu0 %v775
    %v923 = vpop.f32.mrf.mxu0
    %v924 = vadd.f32 %v766, %v923
    %v925 = vpop.f32.mrf.mxu0
    %v926 = vadd.f32 %v766, %v925
    %927 = vmatprep.mubr.f32.mxu0 0.0
    %928 = vmatmul.mubr.f32.gmra.mxu0 %v778
    %v929 = vpop.f32.mrf.mxu0
    %v930 = vadd.f32 %v771, %v929
    %v931 = vpop.f32.mrf.mxu0
    %v932 = vadd.f32 %v771, %v931
    %933 = vdwg.mxu0
    %v934 = vadd.f32 %v847, %v44
    %v935 = vadd.f32 %v849, %v45
    %v936 = vadd.f32 %v924, %v46
    %v937 = vadd.f32 %v926, %v47
    %v938 = vadd.f32 %v853, %v48
    %v939 = vadd.f32 %v855, %v49
    %v940 = vadd.f32 %v930, %v50
    %v941 = vadd.f32 %v932, %v51
    %v942 = vmax.f32 %v934, 0.0
    %v943 = vmax.f32 %v935, 0.0
    %v944 = vmax.f32 %v936, 0.0
    %v945 = vmax.f32 %v937, 0.0
    %v946 = vmax.f32 %v938, 0.0
    %v947 = vmax.f32 %v939, 0.0
    %v948 = vmax.f32 %v940, 0.0
    %v949 = vmax.f32 %v941, 0.0
    %950 = vst [vmem:[#allocation6] sm:$0xff] %v942
    %951 = vst [vmem:[#allocation6 + $0x8] sm:$0xff] %v943
    %952 = vst [vmem:[#allocation6 + $0x10] sm:$0xff] %v944
    %953 = vst [vmem:[#allocation6 + $0x18] sm:$0xff] %v945
    %954 = vst [vmem:[#allocation6 + $0x20] sm:$0xff] %v946
    %955 = vst [vmem:[#allocation6 + $0x28] sm:$0xff] %v947
    %956 = vst [vmem:[#allocation6 + $0x30] sm:$0xff] %v948
    %957 = vst [vmem:[#allocation6 + $0x38] sm:$0xff] %v949
    // Predicated region
    $region38: #{tpu_custom_call.1} parent=1 // pred_check
      _
    $region39: #{tpu_custom_call.1} parent=1 // pred_check_branch
      %959 = sbr.rel (0) target = $region41
    $region40: #{tpu_custom_call.1} parent=1 // pred_region
      %s961 = ssub.s32 1024, 1024
      %962 = vsyncadd [#allocation5], %s961
      %s963 = sshll.u32 [#allocation6], 4
      %s964 = int_to_ptr.vmem [resolvable:$true] %s963
      %969 = dma.vmem_to_hbm [thread:$0]  %s964, 1024, %s8, [#allocation5], 512, 512, 32
    $region41: #{tpu_custom_call.1} parent=1 // pred_fallthru
      _
    // Predicated region
    $region42: #{tpu_custom_call.1} parent=1 // pred_check
      _
    $region43: #{tpu_custom_call.1} parent=1 // pred_check_branch
      %971 = sbr.rel (0) target = $region45
    $region44: #{tpu_custom_call.1} parent=1 // pred_region
      %972 = dma.done [#allocation5], 1024
    $region45: #{tpu_custom_call.1} parent=1 // pred_fallthru
      _
    %973 = vsyncpa [#allocation4], 1
    %974 = vsyncpa [#allocation5], 1

</llo_original>
